<compile_context>
chip_gen: v7x
topology: tpu7x:2x2x1
jax: 0.10.0
libtpu: 0.0.40
codegen_flags: <defaults>
</compile_context>

<pallas_src>
import jax
import jax.numpy as jnp
from jax import lax
from jax.experimental import pallas as pl
from jax.experimental.pallas import tpu as pltpu

_MIB = 1024 * 1024


def _scaling_kernel(x_ref, f_ref, o_ref):
    # x_ref: VMEM (BB, C, TT), f_ref: VMEM (BB, 1, TT) — broadcasts over C.
    # Pure elementwise multiply on the VPU; the kernel is HBM-bandwidth bound.
    o_ref[...] = x_ref[...] * f_ref[...]


def _pick_target_and_vmem():
    """Generation-aware block-size target (bytes) and scoped-VMEM limit."""
    try:
        kind = jax.devices()[0].device_kind.lower()
    except Exception:  # defensive: fall through to the conservative default
        kind = ""
    if "v5" in kind:
        # v5e (0.82 TB/s): per-step overhead already <4% at 4 MiB blocks;
        # bigger blocks would only raise VMEM pressure.
        return 4 * _MIB, 32 * _MIB
    # v6e / v7x / unknown: 8 MiB blocks. Double-buffered x-in + out is
    # 4 * 8 MiB = 32 MiB (+ tiny factor blocks) -> 48 MiB scoped limit stays
    # comfortably under v7x's 64 MiB-per-TC physical VMEM.
    return 8 * _MIB, 48 * _MIB


def _choose_tiles(B, C, T, itemsize, target_bytes):
    """Pick (BB, TT) so one x block is ~target_bytes and layout-legal:
    last block dim is either the full T or a multiple of 128 (lane-dense,
    unmasked vst except an optional ragged tail block), C stays whole
    (full second-to-last extent), and BB divides B exactly."""
    if C * T * itemsize <= target_bytes or T <= 128:
        TT = T  # whole time axis fits in one block / T too small to tile
    else:
        TT = max(128, (target_bytes // (C * itemsize)) // 128 * 128)
        TT = min(TT, (T // 128) * 128)  # a 128-multiple <= T
        if T % 128 == 0:
            # Prefer an even split (no ragged tail); terminates at 128 | T.
            while T % TT != 0 and TT > 128:
                TT -= 128
        # else: keep the 128-multiple TT and let pl.cdiv produce one ragged
        # (masked-store) tail block instead of blowing up VMEM with TT = T.
    # TODO(synk): extreme channel counts (C*128*itemsize > VMEM limit) would
    # additionally need C tiling in multiples of 8; not needed for this module.
    row_bytes = max(1, C * TT * itemsize)
    BB = max(1, min(B, target_bytes // row_bytes))
    while B % BB != 0:  # keep the batch grid exact (no ragged leading blocks)
        BB -= 1
    return BB, TT


def _ensure_min_grid(B, T, BB, TT, total_bytes, min_steps=4, min_bytes=2 * _MIB):
    """For mid/large inputs, guarantee enough grid steps that both v7x
    TensorCores (dimension_semantics='parallel') get work."""
    if total_bytes < min_bytes:
        return BB, TT

    def nsteps(bb, tt):
        return (B // bb) * pl.cdiv(T, tt)

    while nsteps(BB, TT) < min_steps and BB > 1:  # split batch first
        BB -= 1
        while B % BB != 0:
            BB -= 1
    while nsteps(BB, TT) < min_steps and TT > 128 and TT % 128 == 0:
        TT = max(128, (TT // 2) // 128 * 128)  # then split time, 128-aligned
    return BB, TT


def scaling_forward(x, factor, *, in_place=False):
    """x: (B, C, T), factor: (B, 1, T) — returns x * factor (broadcast over C)."""
    B, C, T = x.shape
    itemsize = jnp.dtype(x.dtype).itemsize
    target_bytes, vmem_limit = _pick_target_and_vmem()
    BB, TT = _choose_tiles(B, C, T, itemsize, target_bytes)
    BB, TT = _ensure_min_grid(B, T, BB, TT, B * C * T * itemsize)
    grid = (B // BB, pl.cdiv(T, TT))

    return pl.pallas_call(
        _scaling_kernel,
        out_shape=jax.ShapeDtypeStruct((B, C, T), x.dtype),
        grid_spec=pl.GridSpec(
            grid=grid,
            in_specs=[
                pl.BlockSpec((BB, C, TT), lambda b, t: (b, 0, t)),
                pl.BlockSpec((BB, 1, TT), lambda b, t: (b, 0, t)),
            ],
            out_specs=pl.BlockSpec((BB, C, TT), lambda b, t: (b, 0, t)),
        ),
        # Only alias when the caller guarantees x is dead afterwards (donated
        # under jit).  Otherwise XLA inserts a defensive full copy of x, which
        # doubles HBM traffic for this bandwidth-bound kernel.
        input_output_aliases={0: 0} if in_place else {},
        compiler_params=pltpu.CompilerParams(
            dimension_semantics=("parallel", "parallel"),
            vmem_limit_bytes=vmem_limit,
        ),
    )(x, factor)


class Scaling:
    """JAX/Pallas port of the PyTorch Scaling augmentation."""

    def __init__(self, p, sigma=0.1):
        self.p = float(p)
        self.sigma = float(sigma)
        # Single jit over gate + RNG + pallas_call: no eager per-op dispatch,
        # and the factor generation fuses/overlaps with kernel dispatch.
        self._jitted = jax.jit(self._impl)

    def _impl(self, x, key):
        k_gate, k_factor = jax.random.split(key)
        gate = jax.random.uniform(k_gate, (), dtype=jnp.float32)
        # PyTorch: `if p < rand: return x`  =>  apply scaling iff rand <= p.
        apply = gate <= self.p
        # Sample in f32 (PyTorch parity) then cast to x.dtype.
        noise = jax.random.normal(
            k_factor, (x.shape[0], 1, x.shape[2]), dtype=jnp.float32)
        factor = (1.0 + self.sigma * noise).astype(x.dtype)
        # Gate OUTSIDE the kernel: the identity branch does zero HBM passes.
        out = lax.cond(apply,
                       lambda xx, ff: scaling_forward(xx, ff),
                       lambda xx, ff: xx,
                       x, factor)
        return out, (apply, factor)

    def __call__(self, x, key):
        return self._jitted(x, key)


if __name__ == "__main__":
    key = jax.random.PRNGKey(0)
    k_x, k_aug = jax.random.split(key)

    # Small (batch, channels, timesteps) consistent with the time-series module.
    B, C, T = 4, 8, 128
    x = jax.random.normal(k_x, (B, C, T), dtype=jnp.float32)

    aug = Scaling(p=0.9, sigma=0.1)
    out, (apply, factor) = aug(x, k_aug)
    out = jax.block_until_ready(out)
    assert out.shape == x.shape and out.dtype == x.dtype
    ref = jnp.where(apply, x * factor, x)
    assert jnp.allclose(out, ref, atol=1e-6, rtol=1e-6)

    # Identity path (p=0 => never apply): exercises the lax.cond identity branch.
    aug_off = Scaling(p=0.0, sigma=0.1)
    out_off, (apply_off, _) = aug_off(x, k_aug)
    out_off = jax.block_until_ready(out_off)
    assert bool(apply_off) is False
    assert jnp.allclose(out_off, x, atol=0.0, rtol=0.0)

    # Direct kernel check on a non-128-aligned T (full-extent last block dim).
    B2, C2, T2 = 2, 4, 200
    x2 = jax.random.normal(jax.random.PRNGKey(1), (B2, C2, T2), dtype=jnp.float32)
    f2 = 1.0 + 0.1 * jax.random.normal(
        jax.random.PRNGKey(2), (B2, 1, T2), dtype=jnp.float32)
    out2 = jax.block_until_ready(scaling_forward(x2, f2))
    assert jnp.allclose(out2, x2 * f2, atol=1e-6, rtol=1e-6)

    print("KERNEL_OK")
</pallas_src>

<mosaic_0001>
module attributes {stable_mosaic.version = 11 : i64} {
  func.func @_scaling_kernel(%arg0: i32, %arg1: i32, %arg2: memref<4x8x128xf32, #tpu.memory_space<vmem>>, %arg3: memref<4x1x128xf32, #tpu.memory_space<vmem>>, %arg4: memref<4x8x128xf32, #tpu.memory_space<vmem>>) attributes {dimension_semantics = [#tpu.dimension_semantics<parallel>, #tpu.dimension_semantics<parallel>], iteration_bounds = array<i64: 1, 1>, scalar_prefetch = 0 : i64, scratch_operands = 0 : i64, tpu.core_type = #tpu.core_type<tc>, window_params = [{transform_indices = @transform_0, window_bounds = array<i64: 4, 8, 128>}, {transform_indices = @transform_1, window_bounds = array<i64: 4, 1, 128>}, {transform_indices = @transform_2, window_bounds = array<i64: 4, 8, 128>}]} {
    %c0 = arith.constant 0 : index
    %c0_0 = arith.constant 0 : index
    %c0_1 = arith.constant 0 : index
    %0 = vector.load %arg2[%c0, %c0_0, %c0_1] : memref<4x8x128xf32, #tpu.memory_space<vmem>>, vector<4x8x128xf32>
    %c0_2 = arith.constant 0 : index
    %c0_3 = arith.constant 0 : index
    %c0_4 = arith.constant 0 : index
    %1 = vector.load %arg3[%c0_2, %c0_3, %c0_4] : memref<4x1x128xf32, #tpu.memory_space<vmem>>, vector<4x1x128xf32>
    %2 = vector.broadcast %1 : vector<4x1x128xf32> to vector<4x8x128xf32>
    %3 = arith.mulf %0, %2 : vector<4x8x128xf32>
    %c0_5 = arith.constant 0 : index
    %c0_6 = arith.constant 0 : index
    %c0_7 = arith.constant 0 : index
    %4 = vector.load %arg4[%c0_5, %c0_6, %c0_7] : memref<4x8x128xf32, #tpu.memory_space<vmem>>, vector<4x8x128xf32>
    tpu.vector_store %arg4[%c0_5, %c0_6, %c0_7], %3 {strides = array<i32>} : memref<4x8x128xf32, #tpu.memory_space<vmem>>, vector<4x8x128xf32>,
    return
  }
  func.func @transform_0(%arg0: i32, %arg1: i32) -> (i32, i32, i32) {
    %c0_i32 = arith.constant 0 : i32
    %c0_i32_0 = arith.constant 0 : i32
    return %arg0, %c0_i32, %arg1 : i32, i32, i32
  }
  func.func @transform_1(%arg0: i32, %arg1: i32) -> (i32, i32, i32) {
    %c0_i32 = arith.constant 0 : i32
    %c0_i32_0 = arith.constant 0 : i32
    return %arg0, %c0_i32, %arg1 : i32, i32, i32
  }
  func.func @transform_2(%arg0: i32, %arg1: i32) -> (i32, i32, i32) {
    %c0_i32 = arith.constant 0 : i32
    %c0_i32_0 = arith.constant 0 : i32
    return %arg0, %c0_i32, %arg1 : i32, i32, i32
  }
}

</mosaic_0001>

<llo_original>
// kernel: branch_1_fun.1
$region0: #{branch_1_fun.1}
  #allocation0 [shape = 'u32[]', space=smem, size = 0x4, offset = 0x4, fixed_abs, tag = 'smem constant byte address 0x4 - core index']
  #allocation1 [shape = 'u32[144,128]{1,0:T(1,128)}', space=vmem, size = 0x12000, scoped, tag = 'internal scratch']
  %s0 = inlined_call_operand.vmem [shape: f32[4,8,128], index: 0, kind: input, shape index: {}]
  %s1 = inlined_call_operand.vmem [shape: f32[4,1,128], index: 1, kind: input, shape index: {}]
  %s2 = inlined_call_operand.hbm [shape: f32[4,8,128], index: 2, kind: output, shape index: {}]
  %s3 = sld [smem:[#allocation0]]
  $region18: #{branch_1_fun.1} parent=0
    _
  %s5 = ssub.s32 1, %s3
  %s6 = scalar_select 0, %s5, %s3
  $region1: #{branch_1_fun.1} parent=0
    #allocation2 [shape = 'u8[16384]{0}', space=vmem, size = 0x4000, scoped, tag = 'output window, operand 0, single buffered']
    #allocation3 [shape = 's32[1]{0}', space=sflag, size = 0x4, scoped, tag = 'scoped memory for branch_1_fun.1']
    %7 = vsyncpa [#allocation3], 0
    // Predicated region
    $region2: #{branch_1_fun.1} parent=1 // pred_check
      _
    $region3: #{branch_1_fun.1} parent=1 // pred_check_branch
      %9 = sbr.rel (0) target = $region5
    $region4: #{branch_1_fun.1} parent=1 // pred_region
      _
    $region5: #{branch_1_fun.1} parent=1 // pred_fallthru
      _
    // Predicated region
    $region6: #{branch_1_fun.1} parent=1 // pred_check
      _
    $region7: #{branch_1_fun.1} parent=1 // pred_check_branch
      %11 = sbr.rel (0) target = $region9
    $region8: #{branch_1_fun.1} parent=1 // pred_region
      _
    $region9: #{branch_1_fun.1} parent=1 // pred_fallthru
      _
    %v12 = vld [vmem:[%s0] sm:$0xff]
    %v13 = vld [vmem:[%s0 + $0x8] sm:$0xff]
    %v14 = vld [vmem:[%s0 + $0x10] sm:$0xff]
    %v15 = vld [vmem:[%s0 + $0x18] sm:$0xff]
    %v16 = vld [vmem:[%s1] sm:$0x1]
    %v17 = vld [vmem:[%s1 + $0x1] sm:$0x1]
    %v18 = vld [vmem:[%s1 + $0x2] sm:$0x1]
    %v19 = vld [vmem:[%s1 + $0x3] sm:$0x1]
    %v24 = vlaneseq
    %v25 = vshrl.u32 %v24, 7
    %v26 = vsub.s32 0, %v25
    %v27 = vrot.slane %v16, %v26
    %v28 = vlaneseq
    %v29 = vshrl.u32 %v28, 7
    %v30 = vsub.s32 0, %v29
    %v31 = vrot.slane %v17, %v30
    %v32 = vlaneseq
    %v33 = vshrl.u32 %v32, 7
    %v34 = vsub.s32 0, %v33
    %v35 = vrot.slane %v18, %v34
    %v36 = vlaneseq
    %v37 = vshrl.u32 %v36, 7
    %v38 = vsub.s32 0, %v37
    %v39 = vrot.slane %v19, %v38
    %v44 = vmul.f32 %v12, %v27
    %v45 = vmul.f32 %v13, %v31
    %v46 = vmul.f32 %v14, %v35
    %v47 = vmul.f32 %v15, %v39
    %48 = vst [vmem:[#allocation2] sm:$0xff] %v44
    %49 = vst [vmem:[#allocation2 + $0x8] sm:$0xff] %v45
    %50 = vst [vmem:[#allocation2 + $0x10] sm:$0xff] %v46
    %51 = vst [vmem:[#allocation2 + $0x18] sm:$0xff] %v47
    // Predicated region
    $region10: #{branch_1_fun.1} parent=1 // pred_check
      _
    $region11: #{branch_1_fun.1} parent=1 // pred_check_branch
      %53 = sbr.rel (0) target = $region13
    $region12: #{branch_1_fun.1} parent=1 // pred_region
      %s55 = ssub.s32 512, 512
      %56 = vsyncadd [#allocation3], %s55
      %s57 = sshll.u32 [#allocation2], 4
      %s58 = int_to_ptr.vmem [resolvable:$true] %s57
      %63 = dma.vmem_to_hbm [thread:$0]  %s58, 512, %s2, [#allocation3], 128, 128, 8
    $region13: #{branch_1_fun.1} parent=1 // pred_fallthru
      _
    // Predicated region
    $region14: #{branch_1_fun.1} parent=1 // pred_check
      _
    $region15: #{branch_1_fun.1} parent=1 // pred_check_branch
      %65 = sbr.rel (0) target = $region17
    $region16: #{branch_1_fun.1} parent=1 // pred_region
      %66 = dma.done [#allocation3], 512
    $region17: #{branch_1_fun.1} parent=1 // pred_fallthru
      _
    %67 = vsyncpa [#allocation3], 1

</llo_original>
